<compile_context>
chip_gen: v7x
topology: tpu7x:2x2x1
jax: 0.10.0
libtpu: 0.0.40
codegen_flags: <defaults>
</compile_context>

<pallas_src>
import math

import jax
import jax.numpy as jnp
from jax.experimental import pallas as pl
from jax.experimental.pallas import tpu as pltpu


def _endown_matmul_kernel(x_ref, w_ref, b_ref, o_ref):
    # x_ref: (1, K, tn) bf16   w_ref: (Cout, K) bf16   b_ref: (Cout, 1) f32
    acc = jnp.dot(w_ref[...], x_ref[0], preferred_element_type=jnp.float32)
    o_ref[0] = (acc + b_ref[...]).astype(o_ref.dtype)


def _pick_tile_n(s_out):
    # lane-dense tile of the flattened output spatial dim
    for tn in (512, 256, 128):
        if s_out % tn == 0:
            return tn
    return s_out  # small / odd sizes: single full-extent block


def endown_forward(x, w, b):
    """EnDown.forward: Conv3d(kernel_size=3, stride=2, padding=1).

    x: (B, Cin, D, H, W) fp32 (NCDHW, like PyTorch)
    w: (Cout, Cin, 3, 3, 3) fp32
    b: (Cout,) fp32
    returns (B, Cout, Do, Ho, Wo) fp32
    """
    B, Cin, D, H, W = x.shape
    Cout = w.shape[0]
    Do = (D - 1) // 2 + 1
    Ho = (H - 1) // 2 + 1
    Wo = (W - 1) // 2 + 1
    S = Do * Ho * Wo
    K = 27 * Cin

    # ---- glue: stride-2 tap gather in bf16, channels-first / K-major so the
    #      big spatial dim lands in the lane axis of the matmul output.
    xp = jnp.pad(x, ((0, 0), (0, 0), (1, 1), (1, 1), (1, 1))).astype(jnp.bfloat16)
    taps = []
    for i in range(3):
        for j in range(3):
            for k in range(3):
                taps.append(
                    xp[:, :,
                       i:i + 2 * Do - 1:2,
                       j:j + 2 * Ho - 1:2,
                       k:k + 2 * Wo - 1:2])
    # (B, 27, Cin, Do, Ho, Wo) -> (B, K, S)
    xk = jnp.stack(taps, axis=1).reshape(B, K, S)
    # TODO(synk): for very large volumes, replace this gather with a
    # phase-decomposed input + per-tap index_maps (tap-reduction grid axis with
    # an fp32 VMEM accumulator) so no intermediate is materialized at all.

    w_mat = jnp.transpose(w, (0, 2, 3, 4, 1)).reshape(Cout, K).astype(jnp.bfloat16)
    b_col = b.reshape(Cout, 1).astype(jnp.float32)

    tn = _pick_tile_n(S)
    grid = (B, S // tn)

    out = pl.pallas_call(
        _endown_matmul_kernel,
        out_shape=jax.ShapeDtypeStruct((B, Cout, S), jnp.float32),
        grid_spec=pltpu.PrefetchScalarGridSpec(
            num_scalar_prefetch=0,
            grid=grid,
            in_specs=[
                pl.BlockSpec((1, K, tn), lambda bi, ni: (bi, 0, ni)),
                pl.BlockSpec((Cout, K), lambda bi, ni: (0, 0)),
                pl.BlockSpec((Cout, 1), lambda bi, ni: (0, 0)),
            ],
            out_specs=pl.BlockSpec((1, Cout, tn), lambda bi, ni: (bi, 0, ni)),
        ),
        compiler_params=pltpu.CompilerParams(
            dimension_semantics=("parallel", "parallel")),
    )(xk, w_mat, b_col)

    return out.reshape(B, Cout, Do, Ho, Wo)


if __name__ == "__main__":
    # EnDown(in_channels=16, out_channels=32) as used for the first TransBTS
    # downsample (base=16 -> 32), on a small (2, 16, 16, 16, 16) volume.
    key = jax.random.PRNGKey(0)
    kx, kw, kb = jax.random.split(key, 3)
    B, Cin, Cout, D = 2, 16, 32, 16

    x = jax.random.normal(kx, (B, Cin, D, D, D), jnp.float32)
    fan_in = Cin * 27
    w = jax.random.normal(kw, (Cout, Cin, 3, 3, 3), jnp.float32) / math.sqrt(fan_in)
    b = jax.random.normal(kb, (Cout,), jnp.float32) * 0.01

    fwd = jax.jit(endown_forward)
    y = fwd(x, w, b)
    jax.block_until_ready(y)

    assert y.shape == (B, Cout, D // 2, D // 2, D // 2), y.shape

    # Loose sanity check vs XLA's conv (bf16 MXU operands -> generous tolerance).
    ref = jax.lax.conv_general_dilated(
        x, w, window_strides=(2, 2, 2),
        padding=((1, 1), (1, 1), (1, 1)),
        dimension_numbers=('NCDHW', 'OIDHW', 'NCDHW'),
    ) + b[None, :, None, None, None]
    rel_err = jnp.max(jnp.abs(y - ref)) / (jnp.max(jnp.abs(ref)) + 1e-6)
    assert float(rel_err) < 0.1, f"relative max error {float(rel_err)}"

    print("KERNEL_OK")
</pallas_src>

<mosaic_0001>
module attributes {stable_mosaic.version = 11 : i64} {
  func.func @_endown_matmul_kernel(%arg0: i32, %arg1: i32, %arg2: memref<1x432x512xbf16, #tpu.memory_space<vmem>>, %arg3: memref<32x432xbf16, #tpu.memory_space<vmem>>, %arg4: memref<32x1xf32, #tpu.memory_space<vmem>>, %arg5: memref<1x32x512xf32, #tpu.memory_space<vmem>>) attributes {dimension_semantics = [#tpu.dimension_semantics<parallel>, #tpu.dimension_semantics<parallel>], iteration_bounds = array<i64: 2, 1>, scalar_prefetch = 0 : i64, scratch_operands = 0 : i64, tpu.core_type = #tpu.core_type<tc>, window_params = [{transform_indices = @transform_0, window_bounds = array<i64: 1, 432, 512>}, {pipeline_mode = #tpu.pipeline_mode<synchronous>, transform_indices = @transform_1, window_bounds = array<i64: 32, 432>}, {pipeline_mode = #tpu.pipeline_mode<synchronous>, transform_indices = @transform_2, window_bounds = array<i64: 32, 1>}, {transform_indices = @transform_3, window_bounds = array<i64: 1, 32, 512>}]} {
    %c0 = arith.constant 0 : index
    %c0_0 = arith.constant 0 : index
    %0 = vector.load %arg3[%c0, %c0_0] : memref<32x432xbf16, #tpu.memory_space<vmem>>, vector<32x432xbf16>
    %c0_1 = arith.constant 0 : index
    %c0_2 = arith.constant 0 : index
    %c0_3 = arith.constant 0 : index
    %1 = vector.load %arg2[%c0_1, %c0_2, %c0_3] : memref<1x432x512xbf16, #tpu.memory_space<vmem>>, vector<1x432x512xbf16>
    %2 = vector.shape_cast %1 : vector<1x432x512xbf16> to vector<432x512xbf16>
    %cst = arith.constant dense<0.000000e+00> : vector<32x512xf32>
    %3 = tpu.matmul %0, %2, %cst {dimension_numbers = #tpu.dot_dimension_numbers<[1], [0], [0], [1], [0, 0, 1, 1], [], []>} : vector<32x432xbf16>, vector<432x512xbf16>, vector<32x512xf32> -> vector<32x512xf32>
    %c0_4 = arith.constant 0 : index
    %c0_5 = arith.constant 0 : index
    %4 = vector.load %arg4[%c0_4, %c0_5] : memref<32x1xf32, #tpu.memory_space<vmem>>, vector<32x1xf32>
    %5 = vector.broadcast %4 : vector<32x1xf32> to vector<32x512xf32>
    %6 = arith.addf %3, %5 : vector<32x512xf32>
    %c0_6 = arith.constant 0 : index
    %c0_7 = arith.constant 0 : index
    %c0_8 = arith.constant 0 : index
    %7 = vector.load %arg5[%c0_6, %c0_7, %c0_8] : memref<1x32x512xf32, #tpu.memory_space<vmem>>, vector<1x32x512xf32>
    %8 = vector.shape_cast %7 : vector<1x32x512xf32> to vector<32x512xf32>
    %9 = vector.shape_cast %6 : vector<32x512xf32> to vector<1x32x512xf32>
    tpu.vector_store %arg5[%c0_6, %c0_7, %c0_8], %9 {strides = array<i32>} : memref<1x32x512xf32, #tpu.memory_space<vmem>>, vector<1x32x512xf32>,
    return
  }
  func.func @transform_0(%arg0: i32, %arg1: i32) -> (i32, i32, i32) {
    %c0_i32 = arith.constant 0 : i32
    %c0_i32_0 = arith.constant 0 : i32
    return %arg0, %c0_i32, %arg1 : i32, i32, i32
  }
  func.func @transform_1(%arg0: i32, %arg1: i32) -> (i32, i32) {
    %c0_i32 = arith.constant 0 : i32
    %c0_i32_0 = arith.constant 0 : i32
    %c0_i32_1 = arith.constant 0 : i32
    return %c0_i32, %c0_i32_0 : i32, i32
  }
  func.func @transform_2(%arg0: i32, %arg1: i32) -> (i32, i32) {
    %c0_i32 = arith.constant 0 : i32
    %c0_i32_0 = arith.constant 0 : i32
    %c0_i32_1 = arith.constant 0 : i32
    return %c0_i32, %c0_i32_0 : i32, i32
  }
  func.func @transform_3(%arg0: i32, %arg1: i32) -> (i32, i32, i32) {
    %c0_i32 = arith.constant 0 : i32
    %c0_i32_0 = arith.constant 0 : i32
    return %arg0, %c0_i32, %arg1 : i32, i32, i32
  }
}

</mosaic_0001>

<llo_original>
// kernel: endown_forward.1
$region0: #{endown_forward.1}
  #allocation0 [shape = 'u32[]', space=smem, size = 0x4, offset = 0x4, fixed_abs, tag = 'smem constant byte address 0x4 - core index']
  #allocation1 [shape = 'u32[144,128]{1,0:T(1,128)}', space=vmem, size = 0x12000, scoped, tag = 'internal scratch']
  %s0 = inlined_call_operand.vmem [shape: bf16[2,432,512], index: 0, kind: input, shape index: {}]
  %s1 = inlined_call_operand.vmem [shape: bf16[32,432], index: 1, kind: input, shape index: {}]
  %s2 = inlined_call_operand.vmem [shape: f32[32,1], index: 2, kind: input, shape index: {}]
  %s3 = inlined_call_operand.vmem [shape: f32[2,32,512], index: 3, kind: output, shape index: {}]
  %s4 = sld [smem:[#allocation0]]
  $region45: #{endown_forward.1} parent=0
    _
  %s6 = ssub.s32 1, %s4
  %s7 = scalar_select 0, %s6, %s4
  loop: start=0, step=1, limit=4
  $region2: #{endown_forward.1} parent=0 // loop_pre_header
    _
  $region3: #{endown_forward.1} parent=0 // loop_header
    %s9 = sphi 0, %s13
    %p10 = scmp.ge.s32.totalorder %s9, 4
    %s16 = sphi 0, %s28
    %s17 = sphi 0, %s24
    %s18 = sphi 0, %s16
    %s19 = sphi 0, %s17
    %s20 = sphi 0, %s18
    %s21 = sphi 0, %s19
    %s33 = sphi 0, %s35
    %s36 = sphi 0, %s33
    %s37 = sphi 0, %s36
    %s53 = sphi 0, %s37
    %s57 = sphi 0, %s57
    %s59 = sphi 0, %s57
    %s60 = sphi 0, %s59
    %s74 = sphi 0, %s60
    %s78 = sphi 0, %s78
    %s80 = sphi 0, %s78
    %s81 = sphi 0, %s80
    %s95 = sphi 0, %s81
    %s103 = sphi 0, %s105
    %s106 = sphi 0, %s103
    %s107 = sphi 0, %s106
    %s123 = sphi 0, %s107
  $region4: #{endown_forward.1} parent=0 // loop_header_branch
    %12 = sbr.rel (%p10) target = $region8
  $region5: #{endown_forward.1} parent=0 // loop_body
    %s14 = ssub.s32 %s9, 1
    %s15 = ssub.s32 %s9, 2
    %s22 = sadd.s32 1, %s17
    %p23 = scmp.ge.s32.totalorder %s22, 1
    %s24 = scalar_select %p23, 0, %s22
    %s25 = sadd.s32 1, %s16
    %s26 = scalar_select %p23, %s25, %s16
    %p27 = scmp.ge.s32.totalorder %s26, 2
    %s28 = scalar_select %p27, 0, %s26
    %s29 = ssub.s32 %s16, %s28
    %s30 = ssub.s32 %s17, %s24
    %s31 = sor.u32 %s29, %s30
    %p32 = scmp.eq.s32.totalorder %s31, 0
    %s34 = sadd.s32 %s33, 1
    %s35 = scalar_select %p32, %s33, %s34
    %p38 = pneg %p32
    %p39 = scmp.eq.s32.totalorder %s9, 1
    %p40 = por %p38, %p39
    %p41 = scmp.ne.s32.totalorder %s33, %s36
    %p42 = scmp.eq.s32.totalorder %s9, 0
    %p43 = por %p41, %p42
    %p44 = scmp.ne.s32.totalorder %s33, %s36
    %p45 = scmp.eq.s32.totalorder %s14, 1
    %p46 = por %p44, %p45
    %p47 = scmp.ne.s32.totalorder %s36, %s37
    %p48 = scmp.eq.s32.totalorder %s14, 0
    %p49 = por %p47, %p48
    %p50 = scmp.ne.s32.totalorder %s36, %s37
    %p51 = scmp.eq.s32.totalorder %s15, 1
    %p52 = por %p50, %p51
    %p54 = scmp.ne.s32.totalorder %s37, %s53
    %p55 = scmp.eq.s32.totalorder %s15, 0
    %p56 = por %p54, %p55
    %s58 = sadd.s32 %s57, 1
    %p61 = scmp.eq.s32.totalorder %s9, 1
    %p62 = scmp.ne.s32.totalorder %s57, %s59
    %p63 = scmp.eq.s32.totalorder %s9, 0
    %p64 = por %p62, %p63
    %p65 = scmp.ne.s32.totalorder %s57, %s59
    %p66 = scmp.eq.s32.totalorder %s14, 1
    %p67 = por %p65, %p66
    %p68 = scmp.ne.s32.totalorder %s59, %s60
    %p69 = scmp.eq.s32.totalorder %s14, 0
    %p70 = por %p68, %p69
    %p71 = scmp.ne.s32.totalorder %s59, %s60
    %p72 = scmp.eq.s32.totalorder %s15, 1
    %p73 = por %p71, %p72
    %p75 = scmp.ne.s32.totalorder %s60, %s74
    %p76 = scmp.eq.s32.totalorder %s15, 0
    %p77 = por %p75, %p76
    %s79 = sadd.s32 %s78, 1
    %p82 = scmp.eq.s32.totalorder %s9, 1
    %p83 = scmp.ne.s32.totalorder %s78, %s80
    %p84 = scmp.eq.s32.totalorder %s9, 0
    %p85 = por %p83, %p84
    %p86 = scmp.ne.s32.totalorder %s78, %s80
    %p87 = scmp.eq.s32.totalorder %s14, 1
    %p88 = por %p86, %p87
    %p89 = scmp.ne.s32.totalorder %s80, %s81
    %p90 = scmp.eq.s32.totalorder %s14, 0
    %p91 = por %p89, %p90
    %p92 = scmp.ne.s32.totalorder %s80, %s81
    %p93 = scmp.eq.s32.totalorder %s15, 1
    %p94 = por %p92, %p93
    %p96 = scmp.ne.s32.totalorder %s81, %s95
    %p97 = scmp.eq.s32.totalorder %s15, 0
    %p98 = por %p96, %p97
    %s99 = ssub.s32 %s16, %s28
    %s100 = ssub.s32 %s17, %s24
    %s101 = sor.u32 %s99, %s100
    %p102 = scmp.eq.s32.totalorder %s101, 0
    %s104 = sadd.s32 %s103, 1
    %s105 = scalar_select %p102, %s103, %s104
    %p108 = pneg %p102
    %p109 = scmp.eq.s32.totalorder %s9, 1
    %p110 = por %p108, %p109
    %p111 = scmp.ne.s32.totalorder %s103, %s106
    %p112 = scmp.eq.s32.totalorder %s9, 0
    %p113 = por %p111, %p112
    %p114 = scmp.ne.s32.totalorder %s103, %s106
    %p115 = scmp.eq.s32.totalorder %s14, 1
    %p116 = por %p114, %p115
    %p117 = scmp.ne.s32.totalorder %s106, %s107
    %p118 = scmp.eq.s32.totalorder %s14, 0
    %p119 = por %p117, %p118
    %p120 = scmp.ne.s32.totalorder %s106, %s107
    %p121 = scmp.eq.s32.totalorder %s15, 1
    %p122 = por %p120, %p121
    %p124 = scmp.ne.s32.totalorder %s107, %s123
    %p125 = scmp.eq.s32.totalorder %s15, 0
    %p126 = por %p124, %p125
    %p127 = scmp.le.s32.totalorder 1, %s9
    %p128 = scmp.lt.s32.totalorder %s9, 3
    %p129 = pnand %p127, %p128
    %p130 = pneg %p129
    // Predicated region
    $region9: #{endown_forward.1} parent=5 // pred_check
      _
    $region10: #{endown_forward.1} parent=5 // pred_check_branch
      %132 = sbr.rel (%p129) target = $region12
    $region11: #{endown_forward.1} parent=5 // pred_region
      %s133 = ssub.s32 %s9, 1
      // Predicated region
      $region13: #{endown_forward.1} parent=11 // pred_check
        %p134 = pneg %p70
      $region14: #{endown_forward.1} parent=11 // pred_check_branch
        %136 = sbr.rel (%p134) target = $region16
      $region15: #{endown_forward.1} parent=11 // pred_region
        _
      $region16: #{endown_forward.1} parent=11 // pred_fallthru
        _
      // Predicated region
      $region17: #{endown_forward.1} parent=11 // pred_check
        %p137 = pneg %p91
      $region18: #{endown_forward.1} parent=11 // pred_check_branch
        %139 = sbr.rel (%p137) target = $region20
      $region19: #{endown_forward.1} parent=11 // pred_region
        _
      $region20: #{endown_forward.1} parent=11 // pred_fallthru
        _
    $region12: #{endown_forward.1} parent=5 // pred_fallthru
      _
    %p140 = scmp.lt.s32.totalorder %s9, 2
    // Predicated region
    $region21: #{endown_forward.1} parent=5 // pred_check
      %p141 = pneg %p140
    $region22: #{endown_forward.1} parent=5 // pred_check_branch
      %143 = sbr.rel (%p141) target = $region24
    $region23: #{endown_forward.1} parent=5 // pred_region
      // Predicated region
      $region25: #{endown_forward.1} parent=23 // pred_check
        %p144 = pneg %p43
      $region26: #{endown_forward.1} parent=23 // pred_check_branch
        %146 = sbr.rel (%p144) target = $region28
      $region27: #{endown_forward.1} parent=23 // pred_region
        %s147 = smul.u32 4, %s17
        %p148 = scmp.lt.s32.totalorder %s16, 1
        %s149 = scalar_select %p148, %s16, 1
        %p150 = scmp.lt.s32.totalorder %s147, 3
        %s151 = scalar_select %p150, %s147, 3
        %s152 = smul.addr %s149, 216
        %s153 = sadd.s32 %s151, %s152
        %s154 = smul.addr %s153, 4
        %s155 = scalar_lea.vmem %s0, %s154
        %s156 = smul.u32 4, %s17
      $region28: #{endown_forward.1} parent=23 // pred_fallthru
        _
    $region24: #{endown_forward.1} parent=5 // pred_fallthru
      _
    %p157 = scmp.le.s32.totalorder 1, %s9
    %p158 = scmp.lt.s32.totalorder %s9, 3
    %p159 = pnand %p157, %p158
    %p160 = pneg %p159
    // Predicated region
    $region29: #{endown_forward.1} parent=5 // pred_check
      _
    $region30: #{endown_forward.1} parent=5 // pred_check_branch
      %162 = sbr.rel (%p159) target = $region32
    $region31: #{endown_forward.1} parent=5 // pred_region
      %s163 = ssub.s32 %s9, 1
      %s164 = smul.u32 4, %s19
      %p165 = scmp.lt.s32.totalorder %s18, 1
      %s166 = scalar_select %p165, %s18, 1
      %p167 = scmp.lt.s32.totalorder %s164, 3
      %s168 = scalar_select %p167, %s164, 3
      %s169 = smul.addr %s166, 216
      %s170 = sadd.s32 %s168, %s169
      %s171 = smul.addr %s170, 4
      %s172 = scalar_lea.vmem %s0, %s171
      %p173 = pneg %p49
      %p174 = pneg %p46
      %p175 = pneg %p70
      %p176 = pneg %p67
      %p177 = pneg %p91
      %p178 = pneg %p88
      %p179 = pneg %p119
      %p180 = pneg %p116
      %s181 = smul.u32 4, %s19
      %p182 = scmp.lt.s32.totalorder %s18, 1
      %s183 = scalar_select %p182, %s18, 1
      %p184 = scmp.lt.s32.totalorder %s181, 3
      %s185 = scalar_select %p184, %s181, 3
      %s186 = smul.addr %s183, 16
      %s187 = sadd.s32 %s185, %s186
      %s188 = smul.addr %s187, 8
      %s189 = scalar_lea.vmem %s3, %s188
      %s190 = smul.u32 4, %s19
      %p191 = scmp.lt.s32.totalorder %s18, 1
      %s192 = scalar_select %p191, %s18, 1
      %p193 = scmp.lt.s32.totalorder %s190, 3
      %s194 = scalar_select %p193, %s190, 3
      %s195 = smul.addr %s192, 216
      %s196 = sadd.s32 %s194, %s195
      %s197 = smul.addr %s196, 4
      %s198 = scalar_lea.vmem %s0, %s197
      %s199 = smul.u32 4, %s19
      %s200 = smul.u32 4, %s19
      %p201 = scmp.lt.s32.totalorder %s18, 1
      %s202 = scalar_select %p201, %s18, 1
      %p203 = scmp.lt.s32.totalorder %s200, 3
      %s204 = scalar_select %p203, %s200, 3
      %s205 = smul.addr %s202, 16
      %s206 = sadd.s32 %s204, %s205
      %s207 = smul.addr %s206, 8
      %s208 = scalar_lea.vmem %s3, %s207
      %s209 = smul.u32 4, %s19
      %v211 = vld [vmem:[%s1] sm:$0xff]
      %v212 = vld [vmem:[%s1 + $0x8] sm:$0xff]
      %v213 = vld [vmem:[%s1 + $0x10] sm:$0xff]
      %v214 = vld [vmem:[%s1 + $0x18] sm:$0xff]
      %v215 = vld [vmem:[%s1 + $0x20] sm:$0xff]
      %v216 = vld [vmem:[%s1 + $0x28] sm:$0xff]
      %v217 = vld [vmem:[%s1 + $0x30] sm:$0xff]
      %v218 = vld [vmem:[%s1 + $0x38] sm:$0xff]
      %v219 = vld [vmem:[%s198] sm:$0xff]
      %v220 = vld [vmem:[%s198 + $0x8] sm:$0xff]
      %v221 = vld [vmem:[%s198 + $0x10] sm:$0xff]
      %v222 = vld [vmem:[%s198 + $0x18] sm:$0xff]
      %v223 = vld [vmem:[%s198 + $0x20] sm:$0xff]
      %v224 = vld [vmem:[%s198 + $0x28] sm:$0xff]
      %v225 = vld [vmem:[%s198 + $0x30] sm:$0xff]
      %v226 = vld [vmem:[%s198 + $0x38] sm:$0xff]
      %v227 = vld [vmem:[%s198 + $0x40] sm:$0xff]
      %v228 = vld [vmem:[%s198 + $0x48] sm:$0xff]
      %v229 = vld [vmem:[%s198 + $0x50] sm:$0xff]
      %v230 = vld [vmem:[%s198 + $0x58] sm:$0xff]
      %v231 = vld [vmem:[%s198 + $0x60] sm:$0xff]
      %v232 = vld [vmem:[%s198 + $0x68] sm:$0xff]
      %v233 = vld [vmem:[%s198 + $0x70] sm:$0xff]
      %v234 = vld [vmem:[%s198 + $0x78] sm:$0xff]
      %v235 = vld [vmem:[%s198 + $0x80] sm:$0xff]
      %v236 = vld [vmem:[%s198 + $0x88] sm:$0xff]
      %v237 = vld [vmem:[%s198 + $0x90] sm:$0xff]
      %v238 = vld [vmem:[%s198 + $0x98] sm:$0xff]
      %v239 = vld [vmem:[%s198 + $0xa0] sm:$0xff]
      %v240 = vld [vmem:[%s198 + $0xa8] sm:$0xff]
      %v241 = vld [vmem:[%s198 + $0xb0] sm:$0xff]
      %v242 = vld [vmem:[%s198 + $0xb8] sm:$0xff]
      %v243 = vld [vmem:[%s198 + $0xc0] sm:$0xff]
      %v244 = vld [vmem:[%s198 + $0xc8] sm:$0xff]
      %v245 = vld [vmem:[%s198 + $0xd0] sm:$0xff]
      %v246 = vld [vmem:[%s198 + $0xd8] sm:$0xff]
      %v247 = vld [vmem:[%s198 + $0xe0] sm:$0xff]
      %v248 = vld [vmem:[%s198 + $0xe8] sm:$0xff]
      %v249 = vld [vmem:[%s198 + $0xf0] sm:$0xff]
      %v250 = vld [vmem:[%s198 + $0xf8] sm:$0xff]
      %v251 = vld [vmem:[%s198 + $0x100] sm:$0xff]
      %v252 = vld [vmem:[%s198 + $0x108] sm:$0xff]
      %v253 = vld [vmem:[%s198 + $0x110] sm:$0xff]
      %v254 = vld [vmem:[%s198 + $0x118] sm:$0xff]
      %v255 = vld [vmem:[%s198 + $0x120] sm:$0xff]
      %v256 = vld [vmem:[%s198 + $0x128] sm:$0xff]
      %v257 = vld [vmem:[%s198 + $0x130] sm:$0xff]
      %v258 = vld [vmem:[%s198 + $0x138] sm:$0xff]
      %v259 = vld [vmem:[%s198 + $0x140] sm:$0xff]
      %v260 = vld [vmem:[%s198 + $0x148] sm:$0xff]
      %v261 = vld [vmem:[%s198 + $0x150] sm:$0xff]
      %v262 = vld [vmem:[%s198 + $0x158] sm:$0xff]
      %v263 = vld [vmem:[%s198 + $0x160] sm:$0xff]
      %v264 = vld [vmem:[%s198 + $0x168] sm:$0xff]
      %v265 = vld [vmem:[%s198 + $0x170] sm:$0xff]
      %v266 = vld [vmem:[%s198 + $0x178] sm:$0xff]
      %v267 = vld [vmem:[%s198 + $0x180] sm:$0xff]
      %v268 = vld [vmem:[%s198 + $0x188] sm:$0xff]
      %v269 = vld [vmem:[%s198 + $0x190] sm:$0xff]
      %v270 = vld [vmem:[%s198 + $0x198] sm:$0xff]
      %v271 = vld [vmem:[%s198 + $0x1a0] sm:$0xff]
      %v272 = vld [vmem:[%s198 + $0x1a8] sm:$0xff]
      %v273 = vld [vmem:[%s198 + $0x1b0] sm:$0xff]
      %v274 = vld [vmem:[%s198 + $0x1b8] sm:$0xff]
      %v275 = vld [vmem:[%s198 + $0x1c0] sm:$0xff]
      %v276 = vld [vmem:[%s198 + $0x1c8] sm:$0xff]
      %v277 = vld [vmem:[%s198 + $0x1d0] sm:$0xff]
      %v278 = vld [vmem:[%s198 + $0x1d8] sm:$0xff]
      %v279 = vld [vmem:[%s198 + $0x1e0] sm:$0xff]
      %v280 = vld [vmem:[%s198 + $0x1e8] sm:$0xff]
      %v281 = vld [vmem:[%s198 + $0x1f0] sm:$0xff]
      %v282 = vld [vmem:[%s198 + $0x1f8] sm:$0xff]
      %v283 = vld [vmem:[%s198 + $0x200] sm:$0xff]
      %v284 = vld [vmem:[%s198 + $0x208] sm:$0xff]
      %v285 = vld [vmem:[%s198 + $0x210] sm:$0xff]
      %v286 = vld [vmem:[%s198 + $0x218] sm:$0xff]
      %v287 = vld [vmem:[%s198 + $0x220] sm:$0xff]
      %v288 = vld [vmem:[%s198 + $0x228] sm:$0xff]
      %v289 = vld [vmem:[%s198 + $0x230] sm:$0xff]
      %v290 = vld [vmem:[%s198 + $0x238] sm:$0xff]
      %v291 = vld [vmem:[%s198 + $0x240] sm:$0xff]
      %v292 = vld [vmem:[%s198 + $0x248] sm:$0xff]
      %v293 = vld [vmem:[%s198 + $0x250] sm:$0xff]
      %v294 = vld [vmem:[%s198 + $0x258] sm:$0xff]
      %v295 = vld [vmem:[%s198 + $0x260] sm:$0xff]
      %v296 = vld [vmem:[%s198 + $0x268] sm:$0xff]
      %v297 = vld [vmem:[%s198 + $0x270] sm:$0xff]
      %v298 = vld [vmem:[%s198 + $0x278] sm:$0xff]
      %v299 = vld [vmem:[%s198 + $0x280] sm:$0xff]
      %v300 = vld [vmem:[%s198 + $0x288] sm:$0xff]
      %v301 = vld [vmem:[%s198 + $0x290] sm:$0xff]
      %v302 = vld [vmem:[%s198 + $0x298] sm:$0xff]
      %v303 = vld [vmem:[%s198 + $0x2a0] sm:$0xff]
      %v304 = vld [vmem:[%s198 + $0x2a8] sm:$0xff]
      %v305 = vld [vmem:[%s198 + $0x2b0] sm:$0xff]
      %v306 = vld [vmem:[%s198 + $0x2b8] sm:$0xff]
      %v307 = vld [vmem:[%s198 + $0x2c0] sm:$0xff]
      %v308 = vld [vmem:[%s198 + $0x2c8] sm:$0xff]
      %v309 = vld [vmem:[%s198 + $0x2d0] sm:$0xff]
      %v310 = vld [vmem:[%s198 + $0x2d8] sm:$0xff]
      %v311 = vld [vmem:[%s198 + $0x2e0] sm:$0xff]
      %v312 = vld [vmem:[%s198 + $0x2e8] sm:$0xff]
      %v313 = vld [vmem:[%s198 + $0x2f0] sm:$0xff]
      %v314 = vld [vmem:[%s198 + $0x2f8] sm:$0xff]
      %v315 = vld [vmem:[%s198 + $0x300] sm:$0xff]
      %v316 = vld [vmem:[%s198 + $0x308] sm:$0xff]
      %v317 = vld [vmem:[%s198 + $0x310] sm:$0xff]
      %v318 = vld [vmem:[%s198 + $0x318] sm:$0xff]
      %v319 = vld [vmem:[%s198 + $0x320] sm:$0xff]
      %v320 = vld [vmem:[%s198 + $0x328] sm:$0xff]
      %v321 = vld [vmem:[%s198 + $0x330] sm:$0xff]
      %v322 = vld [vmem:[%s198 + $0x338] sm:$0xff]
      %v323 = vld [vmem:[%s198 + $0x340] sm:$0xff]
      %v324 = vld [vmem:[%s198 + $0x348] sm:$0xff]
      %v325 = vld [vmem:[%s198 + $0x350] sm:$0xff]
      %v326 = vld [vmem:[%s198 + $0x358] sm:$0xff]
      %v327 = vld [vmem:[%s2] sm:$0xff]
      %v328 = vld [vmem:[%s2 + $0x8] sm:$0xff]
      %v329 = vld [vmem:[%s2 + $0x10] sm:$0xff]
      %v330 = vld [vmem:[%s2 + $0x18] sm:$0xff]
      %332 = vset.pattern.permute.xlu0 0
      %333 = vperm.xlu0 %332, %v327
      %v334 = vpop.permute.xlu0 %333
      %337 = vset.pattern.permute.xlu0 0
      %338 = vperm.xlu0 %337, %v328
      %v339 = vpop.permute.xlu0 %338
      %342 = vset.pattern.permute.xlu0 0
      %343 = vperm.xlu0 %342, %v329
      %v344 = vpop.permute.xlu0 %343
      %347 = vset.pattern.permute.xlu0 0
      %348 = vperm.xlu0 %347, %v330
      %v349 = vpop.permute.xlu0 %348
      %v359 = vunpack.c.l.b16 %v211
      %v360 = vunpack.c.h.b16 %v211
      %v361 = vunpack.c.l.b16 %v212
      %v362 = vunpack.c.h.b16 %v212
      %v363 = vunpack.c.l.b16 %v213
      %v364 = vunpack.c.h.b16 %v213
      %v365 = vunpack.c.l.b16 %v214
      %v366 = vunpack.c.h.b16 %v214
      %v367 = vunpack.c.l.b16 %v215
      %v368 = vunpack.c.h.b16 %v215
      %v369 = vunpack.c.l.b16 %v216
      %v370 = vunpack.c.h.b16 %v216
      %v371 = vunpack.c.l.b16 %v217
      %v372 = vunpack.c.h.b16 %v217
      %v373 = vunpack.c.l.b16 %v218
      %v374 = vunpack.c.h.b16 %v218
      %v375 = vpack.c.b16 %v363, %v359
      %v376 = vpack.c.b16 %v364, %v360
      %v377 = vpack.c.b16 %v365, %v361
      %v378 = vpack.c.b16 %v366, %v362
      %v379 = vpack.c.b16 %v371, %v367
      %v380 = vpack.c.b16 %v372, %v368
      %v381 = vpack.c.b16 %v373, %v369
      %v382 = vpack.c.b16 %v374, %v370
      %v497 = vunpack.c.l.b16 %v219
      %v498 = vunpack.c.h.b16 %v219
      %v499 = vunpack.c.l.b16 %v220
      %v500 = vunpack.c.h.b16 %v220
      %v501 = vunpack.c.l.b16 %v221
      %v502 = vunpack.c.h.b16 %v221
      %v503 = vunpack.c.l.b16 %v222
      %v504 = vunpack.c.h.b16 %v222
      %v505 = vunpack.c.l.b16 %v223
      %v506 = vunpack.c.h.b16 %v223
      %v507 = vunpack.c.l.b16 %v224
      %v508 = vunpack.c.h.b16 %v224
      %v509 = vunpack.c.l.b16 %v225
      %v510 = vunpack.c.h.b16 %v225
      %v511 = vunpack.c.l.b16 %v226
      %v512 = vunpack.c.h.b16 %v226
      %v513 = vunpack.c.l.b16 %v227
      %v514 = vunpack.c.h.b16 %v227
      %v515 = vunpack.c.l.b16 %v228
      %v516 = vunpack.c.h.b16 %v228
      %v517 = vunpack.c.l.b16 %v229
      %v518 = vunpack.c.h.b16 %v229
      %v519 = vunpack.c.l.b16 %v230
      %v520 = vunpack.c.h.b16 %v230
      %v521 = vunpack.c.l.b16 %v231
      %v522 = vunpack.c.h.b16 %v231
      %v523 = vunpack.c.l.b16 %v232
      %v524 = vunpack.c.h.b16 %v232
      %v525 = vunpack.c.l.b16 %v233
      %v526 = vunpack.c.h.b16 %v233
      %v527 = vunpack.c.l.b16 %v234
      %v528 = vunpack.c.h.b16 %v234
      %v529 = vunpack.c.l.b16 %v235
      %v530 = vunpack.c.h.b16 %v235
      %v531 = vunpack.c.l.b16 %v236
      %v532 = vunpack.c.h.b16 %v236
      %v533 = vunpack.c.l.b16 %v237
      %v534 = vunpack.c.h.b16 %v237
      %v535 = vunpack.c.l.b16 %v238
      %v536 = vunpack.c.h.b16 %v238
      %v537 = vunpack.c.l.b16 %v239
      %v538 = vunpack.c.h.b16 %v239
      %v539 = vunpack.c.l.b16 %v240
      %v540 = vunpack.c.h.b16 %v240
      %v541 = vunpack.c.l.b16 %v241
      %v542 = vunpack.c.h.b16 %v241
      %v543 = vunpack.c.l.b16 %v242
      %v544 = vunpack.c.h.b16 %v242
      %v545 = vunpack.c.l.b16 %v243
      %v546 = vunpack.c.h.b16 %v243
      %v547 = vunpack.c.l.b16 %v244
      %v548 = vunpack.c.h.b16 %v244
      %v549 = vunpack.c.l.b16 %v245
      %v550 = vunpack.c.h.b16 %v245
      %v551 = vunpack.c.l.b16 %v246
      %v552 = vunpack.c.h.b16 %v246
      %v553 = vunpack.c.l.b16 %v247
      %v554 = vunpack.c.h.b16 %v247
      %v555 = vunpack.c.l.b16 %v248
      %v556 = vunpack.c.h.b16 %v248
      %v557 = vunpack.c.l.b16 %v249
      %v558 = vunpack.c.h.b16 %v249
      %v559 = vunpack.c.l.b16 %v250
      %v560 = vunpack.c.h.b16 %v250
      %v561 = vunpack.c.l.b16 %v251
      %v562 = vunpack.c.h.b16 %v251
      %v563 = vunpack.c.l.b16 %v252
      %v564 = vunpack.c.h.b16 %v252
      %v565 = vunpack.c.l.b16 %v253
      %v566 = vunpack.c.h.b16 %v253
      %v567 = vunpack.c.l.b16 %v254
      %v568 = vunpack.c.h.b16 %v254
      %v569 = vunpack.c.l.b16 %v255
      %v570 = vunpack.c.h.b16 %v255
      %v571 = vunpack.c.l.b16 %v256
      %v572 = vunpack.c.h.b16 %v256
      %v573 = vunpack.c.l.b16 %v257
      %v574 = vunpack.c.h.b16 %v257
      %v575 = vunpack.c.l.b16 %v258
      %v576 = vunpack.c.h.b16 %v258
      %v577 = vunpack.c.l.b16 %v259
      %v578 = vunpack.c.h.b16 %v259
      %v579 = vunpack.c.l.b16 %v260
      %v580 = vunpack.c.h.b16 %v260
      %v581 = vunpack.c.l.b16 %v261
      %v582 = vunpack.c.h.b16 %v261
      %v583 = vunpack.c.l.b16 %v262
      %v584 = vunpack.c.h.b16 %v262
      %v585 = vunpack.c.l.b16 %v263
      %v586 = vunpack.c.h.b16 %v263
      %v587 = vunpack.c.l.b16 %v264
      %v588 = vunpack.c.h.b16 %v264
      %v589 = vunpack.c.l.b16 %v265
      %v590 = vunpack.c.h.b16 %v265
      %v591 = vunpack.c.l.b16 %v266
      %v592 = vunpack.c.h.b16 %v266
      %v593 = vunpack.c.l.b16 %v267
      %v594 = vunpack.c.h.b16 %v267
      %v595 = vunpack.c.l.b16 %v268
      %v596 = vunpack.c.h.b16 %v268
      %v597 = vunpack.c.l.b16 %v269
      %v598 = vunpack.c.h.b16 %v269
      %v599 = vunpack.c.l.b16 %v270
      %v600 = vunpack.c.h.b16 %v270
      %v601 = vunpack.c.l.b16 %v271
      %v602 = vunpack.c.h.b16 %v271
      %v603 = vunpack.c.l.b16 %v272
      %v604 = vunpack.c.h.b16 %v272
      %v605 = vunpack.c.l.b16 %v273
      %v606 = vunpack.c.h.b16 %v273
      %v607 = vunpack.c.l.b16 %v274
      %v608 = vunpack.c.h.b16 %v274
      %v609 = vunpack.c.l.b16 %v275
      %v610 = vunpack.c.h.b16 %v275
      %v611 = vunpack.c.l.b16 %v276
      %v612 = vunpack.c.h.b16 %v276
      %v613 = vunpack.c.l.b16 %v277
      %v614 = vunpack.c.h.b16 %v277
      %v615 = vunpack.c.l.b16 %v278
      %v616 = vunpack.c.h.b16 %v278
      %v617 = vunpack.c.l.b16 %v279
      %v618 = vunpack.c.h.b16 %v279
      %v619 = vunpack.c.l.b16 %v280
      %v620 = vunpack.c.h.b16 %v280
      %v621 = vunpack.c.l.b16 %v281
      %v622 = vunpack.c.h.b16 %v281
      %v623 = vunpack.c.l.b16 %v282
      %v624 = vunpack.c.h.b16 %v282
      %v625 = vunpack.c.l.b16 %v283
      %v626 = vunpack.c.h.b16 %v283
      %v627 = vunpack.c.l.b16 %v284
      %v628 = vunpack.c.h.b16 %v284
      %v629 = vunpack.c.l.b16 %v285
      %v630 = vunpack.c.h.b16 %v285
      %v631 = vunpack.c.l.b16 %v286
      %v632 = vunpack.c.h.b16 %v286
      %v633 = vunpack.c.l.b16 %v287
      %v634 = vunpack.c.h.b16 %v287
      %v635 = vunpack.c.l.b16 %v288
      %v636 = vunpack.c.h.b16 %v288
      %v637 = vunpack.c.l.b16 %v289
      %v638 = vunpack.c.h.b16 %v289
      %v639 = vunpack.c.l.b16 %v290
      %v640 = vunpack.c.h.b16 %v290
      %v641 = vunpack.c.l.b16 %v291
      %v642 = vunpack.c.h.b16 %v291
      %v643 = vunpack.c.l.b16 %v292
      %v644 = vunpack.c.h.b16 %v292
      %v645 = vunpack.c.l.b16 %v293
      %v646 = vunpack.c.h.b16 %v293
      %v647 = vunpack.c.l.b16 %v294
      %v648 = vunpack.c.h.b16 %v294
      %v649 = vunpack.c.l.b16 %v295
      %v650 = vunpack.c.h.b16 %v295
      %v651 = vunpack.c.l.b16 %v296
      %v652 = vunpack.c.h.b16 %v296
      %v653 = vunpack.c.l.b16 %v297
      %v654 = vunpack.c.h.b16 %v297
      %v655 = vunpack.c.l.b16 %v298
      %v656 = vunpack.c.h.b16 %v298
      %v657 = vunpack.c.l.b16 %v299
      %v658 = vunpack.c.h.b16 %v299
      %v659 = vunpack.c.l.b16 %v300
      %v660 = vunpack.c.h.b16 %v300
      %v661 = vunpack.c.l.b16 %v301
      %v662 = vunpack.c.h.b16 %v301
      %v663 = vunpack.c.l.b16 %v302
      %v664 = vunpack.c.h.b16 %v302
      %v665 = vunpack.c.l.b16 %v303
      %v666 = vunpack.c.h.b16 %v303
      %v667 = vunpack.c.l.b16 %v304
      %v668 = vunpack.c.h.b16 %v304
      %v669 = vunpack.c.l.b16 %v305
      %v670 = vunpack.c.h.b16 %v305
      %v671 = vunpack.c.l.b16 %v306
      %v672 = vunpack.c.h.b16 %v306
      %v673 = vunpack.c.l.b16 %v307
      %v674 = vunpack.c.h.b16 %v307
      %v675 = vunpack.c.l.b16 %v308
      %v676 = vunpack.c.h.b16 %v308
      %v677 = vunpack.c.l.b16 %v309
      %v678 = vunpack.c.h.b16 %v309
      %v679 = vunpack.c.l.b16 %v310
      %v680 = vunpack.c.h.b16 %v310
      %v681 = vunpack.c.l.b16 %v311
      %v682 = vunpack.c.h.b16 %v311
      %v683 = vunpack.c.l.b16 %v312
      %v684 = vunpack.c.h.b16 %v312
      %v685 = vunpack.c.l.b16 %v313
      %v686 = vunpack.c.h.b16 %v313
      %v687 = vunpack.c.l.b16 %v314
      %v688 = vunpack.c.h.b16 %v314
      %v689 = vunpack.c.l.b16 %v315
      %v690 = vunpack.c.h.b16 %v315
      %v691 = vunpack.c.l.b16 %v316
      %v692 = vunpack.c.h.b16 %v316
      %v693 = vunpack.c.l.b16 %v317
      %v694 = vunpack.c.h.b16 %v317
      %v695 = vunpack.c.l.b16 %v318
      %v696 = vunpack.c.h.b16 %v318
      %v697 = vunpack.c.l.b16 %v319
      %v698 = vunpack.c.h.b16 %v319
      %v699 = vunpack.c.l.b16 %v320
      %v700 = vunpack.c.h.b16 %v320
      %v701 = vunpack.c.l.b16 %v321
      %v702 = vunpack.c.h.b16 %v321
      %v703 = vunpack.c.l.b16 %v322
      %v704 = vunpack.c.h.b16 %v322
      %v705 = vunpack.c.l.b16 %v323
      %v706 = vunpack.c.h.b16 %v323
      %v707 = vunpack.c.l.b16 %v324
      %v708 = vunpack.c.h.b16 %v324
      %v709 = vunpack.c.l.b16 %v325
      %v710 = vunpack.c.h.b16 %v325
      %v711 = vunpack.c.l.b16 %v326
      %v712 = vunpack.c.h.b16 %v326
      %v713 = vpack.c.b16 %v501, %v497
      %v714 = vpack.c.b16 %v502, %v498
      %v715 = vpack.c.b16 %v503, %v499
      %v716 = vpack.c.b16 %v504, %v500
      %v717 = vpack.c.b16 %v509, %v505
      %v718 = vpack.c.b16 %v510, %v506
      %v719 = vpack.c.b16 %v511, %v507
      %v720 = vpack.c.b16 %v512, %v508
      %v721 = vpack.c.b16 %v517, %v513
      %v722 = vpack.c.b16 %v518, %v514
      %v723 = vpack.c.b16 %v519, %v515
      %v724 = vpack.c.b16 %v520, %v516
      %v725 = vpack.c.b16 %v525, %v521
      %v726 = vpack.c.b16 %v526, %v522
      %v727 = vpack.c.b16 %v527, %v523
      %v728 = vpack.c.b16 %v528, %v524
      %v729 = vpack.c.b16 %v533, %v529
      %v730 = vpack.c.b16 %v534, %v530
      %v731 = vpack.c.b16 %v535, %v531
      %v732 = vpack.c.b16 %v536, %v532
      %v733 = vpack.c.b16 %v541, %v537
      %v734 = vpack.c.b16 %v542, %v538
      %v735 = vpack.c.b16 %v543, %v539
      %v736 = vpack.c.b16 %v544, %v540
      %v737 = vpack.c.b16 %v549, %v545
      %v738 = vpack.c.b16 %v550, %v546
      %v739 = vpack.c.b16 %v551, %v547
      %v740 = vpack.c.b16 %v552, %v548
      %v741 = vpack.c.b16 %v557, %v553
      %v742 = vpack.c.b16 %v558, %v554
      %v743 = vpack.c.b16 %v559, %v555
      %v744 = vpack.c.b16 %v560, %v556
      %v745 = vpack.c.b16 %v565, %v561
      %v746 = vpack.c.b16 %v566, %v562
      %v747 = vpack.c.b16 %v567, %v563
      %v748 = vpack.c.b16 %v568, %v564
      %v749 = vpack.c.b16 %v573, %v569
      %v750 = vpack.c.b16 %v574, %v570
      %v751 = vpack.c.b16 %v575, %v571
      %v752 = vpack.c.b16 %v576, %v572
      %v753 = vpack.c.b16 %v581, %v577
      %v754 = vpack.c.b16 %v582, %v578
      %v755 = vpack.c.b16 %v583, %v579
      %v756 = vpack.c.b16 %v584, %v580
      %v757 = vpack.c.b16 %v589, %v585
      %v758 = vpack.c.b16 %v590, %v586
      %v759 = vpack.c.b16 %v591, %v587
      %v760 = vpack.c.b16 %v592, %v588
      %v761 = vpack.c.b16 %v597, %v593
      %v762 = vpack.c.b16 %v598, %v594
      %v763 = vpack.c.b16 %v599, %v595
      %v764 = vpack.c.b16 %v600, %v596
      %v765 = vpack.c.b16 %v605, %v601
      %v766 = vpack.c.b16 %v606, %v602
      %v767 = vpack.c.b16 %v607, %v603
      %v768 = vpack.c.b16 %v608, %v604
      %v769 = vpack.c.b16 %v613, %v609
      %v770 = vpack.c.b16 %v614, %v610
      %v771 = vpack.c.b16 %v615, %v611
      %v772 = vpack.c.b16 %v616, %v612
      %v773 = vpack.c.b16 %v621, %v617
      %v774 = vpack.c.b16 %v622, %v618
      %v775 = vpack.c.b16 %v623, %v619
      %v776 = vpack.c.b16 %v624, %v620
      %v777 = vpack.c.b16 %v629, %v625
      %v778 = vpack.c.b16 %v630, %v626
      %v779 = vpack.c.b16 %v631, %v627
      %v780 = vpack.c.b16 %v632, %v628
      %v781 = vpack.c.b16 %v637, %v633
      %v782 = vpack.c.b16 %v638, %v634
      %v783 = vpack.c.b16 %v639, %v635
      %v784 = vpack.c.b16 %v640, %v636
      %v785 = vpack.c.b16 %v645, %v641
      %v786 = vpack.c.b16 %v646, %v642
      %v787 = vpack.c.b16 %v647, %v643
      %v788 = vpack.c.b16 %v648, %v644
      %v789 = vpack.c.b16 %v653, %v649
      %v790 = vpack.c.b16 %v654, %v650
      %v791 = vpack.c.b16 %v655, %v651
      %v792 = vpack.c.b16 %v656, %v652
      %v793 = vpack.c.b16 %v661, %v657
      %v794 = vpack.c.b16 %v662, %v658
      %v795 = vpack.c.b16 %v663, %v659
      %v796 = vpack.c.b16 %v664, %v660
      %v797 = vpack.c.b16 %v669, %v665
      %v798 = vpack.c.b16 %v670, %v666
      %v799 = vpack.c.b16 %v671, %v667
      %v800 = vpack.c.b16 %v672, %v668
      %v801 = vpack.c.b16 %v677, %v673
      %v802 = vpack.c.b16 %v678, %v674
      %v803 = vpack.c.b16 %v679, %v675
      %v804 = vpack.c.b16 %v680, %v676
      %v805 = vpack.c.b16 %v685, %v681
      %v806 = vpack.c.b16 %v686, %v682
      %v807 = vpack.c.b16 %v687, %v683
      %v808 = vpack.c.b16 %v688, %v684
      %v809 = vpack.c.b16 %v693, %v689
      %v810 = vpack.c.b16 %v694, %v690
      %v811 = vpack.c.b16 %v695, %v691
      %v812 = vpack.c.b16 %v696, %v692
      %v813 = vpack.c.b16 %v701, %v697
      %v814 = vpack.c.b16 %v702, %v698
      %v815 = vpack.c.b16 %v703, %v699
      %v816 = vpack.c.b16 %v704, %v700
      %v817 = vpack.c.b16 %v709, %v705
      %v818 = vpack.c.b16 %v710, %v706
      %v819 = vpack.c.b16 %v711, %v707
      %v820 = vpack.c.b16 %v712, %v708
      %vm929 = vcmask 392192
      %v931 = vsel %vm929, %v378, 0
      %v934 = vsel %vm929, %v382, 0
      %936 = vmatprep.subr.bf16.mxu0 %v714
      %937 = vmatpush1.bf16.msra.mxu0 %v713
      %938 = vmatprep.subr.bf16.mxu0 %v718
      %939 = vmatpush1.bf16.msra.mxu0 %v717
      %940 = vmatprep.subr.bf16.mxu0 %v722
      %941 = vmatpush1.bf16.msra.mxu0 %v721
      %942 = vmatprep.subr.bf16.mxu0 %v726
      %943 = vmatpush1.bf16.msra.mxu0 %v725
      %944 = vmatprep.subr.bf16.mxu0 %v730
      %945 = vmatpush1.bf16.msra.mxu0 %v729
      %946 = vmatprep.subr.bf16.mxu0 %v734
      %947 = vmatpush1.bf16.msra.mxu0 %v733
      %948 = vmatprep.subr.bf16.mxu0 %v738
      %949 = vmatpush1.bf16.msra.mxu0 %v737
      %950 = vmatprep.subr.bf16.mxu0 %v742
      %951 = vmatpush1.bf16.msra.mxu0 %v741
      %952 = vmatprep.subr.bf16.mxu0 %v746
      %953 = vmatpush1.bf16.msra.mxu0 %v745
      %954 = vmatprep.subr.bf16.mxu0 %v750
      %955 = vmatpush1.bf16.msra.mxu0 %v749
      %956 = vmatprep.subr.bf16.mxu0 %v754
      %957 = vmatpush1.bf16.msra.mxu0 %v753
      %958 = vmatprep.subr.bf16.mxu0 %v758
      %959 = vmatpush1.bf16.msra.mxu0 %v757
      %960 = vmatprep.subr.bf16.mxu0 %v762
      %961 = vmatpush1.bf16.msra.mxu0 %v761
      %962 = vmatprep.subr.bf16.mxu0 %v766
      %963 = vmatpush1.bf16.msra.mxu0 %v765
      %964 = vmatprep.subr.bf16.mxu0 %v770
      %965 = vmatpush1.bf16.msra.mxu0 %v769
      %966 = vmatprep.subr.bf16.mxu0 %v774
      %967 = vmatpush1.bf16.msra.mxu0 %v773
      %968 = vmatprep.mubr.bf16.mxu0 %v376
      %969 = vmatmul.mubr.bf16.gmra.mrb[0].mxu0 %v375
      %v970 = vpop.f32.mrb[0].mxu0
      %v971 = vadd.f32 %v334, %v970
      %v972 = vpop.f32.mrb[0].mxu0
      %v973 = vadd.f32 %v334, %v972
      %v974 = vpop.f32.mrb[0].mxu0
      %v975 = vadd.f32 %v339, %v974
      %v976 = vpop.f32.mrb[0].mxu0
      %v977 = vadd.f32 %v339, %v976
      %978 = vmatprep.mubr.bf16.mxu0 %v380
      %979 = vmatmul.mubr.bf16.gmra.mrb[0].mxu0 %v379
      %v980 = vpop.f32.mrb[0].mxu0
      %v981 = vadd.f32 %v344, %v980
      %v982 = vpop.f32.mrb[0].mxu0
      %v983 = vadd.f32 %v344, %v982
      %v984 = vpop.f32.mrb[0].mxu0
      %v985 = vadd.f32 %v349, %v984
      %v986 = vpop.f32.mrb[0].mxu0
      %v987 = vadd.f32 %v349, %v986
      %988 = vdwg.mxu0
      %989 = vmatprep.subr.bf16.mxu0 %v778
      %990 = vmatpush1.bf16.msra.mxu0 %v777
      %991 = vmatprep.subr.bf16.mxu0 %v782
      %992 = vmatpush1.bf16.msra.mxu0 %v781
      %993 = vmatprep.subr.bf16.mxu0 %v786
      %994 = vmatpush1.bf16.msra.mxu0 %v785
      %995 = vmatprep.subr.bf16.mxu0 %v790
      %996 = vmatpush1.bf16.msra.mxu0 %v789
      %997 = vmatprep.subr.bf16.mxu0 %v794
      %998 = vmatpush1.bf16.msra.mxu0 %v793
      %999 = vmatprep.subr.bf16.mxu0 %v798
      %1000 = vmatpush1.bf16.msra.mxu0 %v797
      %1001 = vmatprep.subr.bf16.mxu0 %v802
      %1002 = vmatpush1.bf16.msra.mxu0 %v801
      %1003 = vmatprep.subr.bf16.mxu0 %v806
      %1004 = vmatpush1.bf16.msra.mxu0 %v805
      %1005 = vmatprep.subr.bf16.mxu0 %v810
      %1006 = vmatpush1.bf16.msra.mxu0 %v809
      %1007 = vmatprep.subr.bf16.mxu0 %v814
      %1008 = vmatpush1.bf16.msra.mxu0 %v813
      %1009 = vmatprep.subr.bf16.mxu0 %v818
      %1010 = vmatpush1.bf16.msra.mxu0 %v817
      %1011 = vmatprep.subr.bf16.mxu0 0
      %1012 = vmatpush1.bf16.msra.mxu0 0
      %1013 = vmatprep.subr.bf16.mxu0 0
      %1014 = vmatpush1.bf16.msra.mxu0 0
      %1015 = vmatprep.subr.bf16.mxu0 0
      %1016 = vmatpush1.bf16.msra.mxu0 0
      %1017 = vmatprep.subr.bf16.mxu0 0
      %1018 = vmatpush1.bf16.msra.mxu0 0
      %1019 = vmatprep.subr.bf16.mxu0 0
      %1020 = vmatpush1.bf16.msra.mxu0 0
      %1021 = vmatprep.mubr.bf16.mxu0 %v931
      %1022 = vmatmul.mubr.bf16.gmra.mrb[0].mxu0 %v377
      %v1023 = vpop.f32.mrb[0].mxu0
      %v1024 = vadd.f32 %v971, %v1023
      %v1025 = vpop.f32.mrb[0].mxu0
      %v1026 = vadd.f32 %v973, %v1025
      %v1027 = vpop.f32.mrb[0].mxu0
      %v1028 = vadd.f32 %v975, %v1027
      %v1029 = vpop.f32.mrb[0].mxu0
      %v1030 = vadd.f32 %v977, %v1029
      %1031 = vmatprep.mubr.bf16.mxu0 %v934
      %1032 = vmatmul.mubr.bf16.gmra.mrb[0].mxu0 %v381
      %v1033 = vpop.f32.mrb[0].mxu0
      %v1034 = vadd.f32 %v981, %v1033
      %v1035 = vpop.f32.mrb[0].mxu0
      %v1036 = vadd.f32 %v983, %v1035
      %v1037 = vpop.f32.mrb[0].mxu0
      %v1038 = vadd.f32 %v985, %v1037
      %v1039 = vpop.f32.mrb[0].mxu0
      %v1040 = vadd.f32 %v987, %v1039
      %1041 = vdwg.mxu0
      %1042 = vmatprep.subr.bf16.mxu0 %v716
      %1043 = vmatpush1.bf16.msra.mxu0 %v715
      %1044 = vmatprep.subr.bf16.mxu0 %v720
      %1045 = vmatpush1.bf16.msra.mxu0 %v719
      %1046 = vmatprep.subr.bf16.mxu0 %v724
      %1047 = vmatpush1.bf16.msra.mxu0 %v723
      %1048 = vmatprep.subr.bf16.mxu0 %v728
      %1049 = vmatpush1.bf16.msra.mxu0 %v727
      %1050 = vmatprep.subr.bf16.mxu0 %v732
      %1051 = vmatpush1.bf16.msra.mxu0 %v731
      %1052 = vmatprep.subr.bf16.mxu0 %v736
      %1053 = vmatpush1.bf16.msra.mxu0 %v735
      %1054 = vmatprep.subr.bf16.mxu0 %v740
      %1055 = vmatpush1.bf16.msra.mxu0 %v739
      %1056 = vmatprep.subr.bf16.mxu0 %v744
      %1057 = vmatpush1.bf16.msra.mxu0 %v743
      %1058 = vmatprep.subr.bf16.mxu0 %v748
      %1059 = vmatpush1.bf16.msra.mxu0 %v747
      %1060 = vmatprep.subr.bf16.mxu0 %v752
      %1061 = vmatpush1.bf16.msra.mxu0 %v751
      %1062 = vmatprep.subr.bf16.mxu0 %v756
      %1063 = vmatpush1.bf16.msra.mxu0 %v755
      %1064 = vmatprep.subr.bf16.mxu0 %v760
      %1065 = vmatpush1.bf16.msra.mxu0 %v759
      %1066 = vmatprep.subr.bf16.mxu0 %v764
      %1067 = vmatpush1.bf16.msra.mxu0 %v763
      %1068 = vmatprep.subr.bf16.mxu0 %v768
      %1069 = vmatpush1.bf16.msra.mxu0 %v767
      %1070 = vmatprep.subr.bf16.mxu0 %v772
      %1071 = vmatpush1.bf16.msra.mxu0 %v771
      %1072 = vmatprep.subr.bf16.mxu0 %v776
      %1073 = vmatpush1.bf16.msra.mxu0 %v775
      %1074 = vmatprep.mubr.bf16.mxu0 %v376
      %1075 = vmatmul.mubr.bf16.gmra.mrb[0].mxu0 %v375
      %v1076 = vpop.f32.mrb[0].mxu0
      %v1077 = vadd.f32 %v334, %v1076
      %v1078 = vpop.f32.mrb[0].mxu0
      %v1079 = vadd.f32 %v334, %v1078
      %v1080 = vpop.f32.mrb[0].mxu0
      %v1081 = vadd.f32 %v339, %v1080
      %v1082 = vpop.f32.mrb[0].mxu0
      %v1083 = vadd.f32 %v339, %v1082
      %1084 = vmatprep.mubr.bf16.mxu0 %v380
      %1085 = vmatmul.mubr.bf16.gmra.mrb[0].mxu0 %v379
      %v1086 = vpop.f32.mrb[0].mxu0
      %v1087 = vadd.f32 %v344, %v1086
      %v1088 = vpop.f32.mrb[0].mxu0
      %v1089 = vadd.f32 %v344, %v1088
      %v1090 = vpop.f32.mrb[0].mxu0
      %v1091 = vadd.f32 %v349, %v1090
      %v1092 = vpop.f32.mrb[0].mxu0
      %v1093 = vadd.f32 %v349, %v1092
      %1094 = vdwg.mxu0
      %1095 = vmatprep.subr.bf16.mxu0 %v780
      %1096 = vmatpush1.bf16.msra.mxu0 %v779
      %1097 = vmatprep.subr.bf16.mxu0 %v784
      %1098 = vmatpush1.bf16.msra.mxu0 %v783
      %1099 = vmatprep.subr.bf16.mxu0 %v788
      %1100 = vmatpush1.bf16.msra.mxu0 %v787
      %1101 = vmatprep.subr.bf16.mxu0 %v792
      %1102 = vmatpush1.bf16.msra.mxu0 %v791
      %1103 = vmatprep.subr.bf16.mxu0 %v796
      %1104 = vmatpush1.bf16.msra.mxu0 %v795
      %1105 = vmatprep.subr.bf16.mxu0 %v800
      %1106 = vmatpush1.bf16.msra.mxu0 %v799
      %1107 = vmatprep.subr.bf16.mxu0 %v804
      %1108 = vmatpush1.bf16.msra.mxu0 %v803
      %1109 = vmatprep.subr.bf16.mxu0 %v808
      %1110 = vmatpush1.bf16.msra.mxu0 %v807
      %1111 = vmatprep.subr.bf16.mxu0 %v812
      %1112 = vmatpush1.bf16.msra.mxu0 %v811
      %1113 = vmatprep.subr.bf16.mxu0 %v816
      %1114 = vmatpush1.bf16.msra.mxu0 %v815
      %1115 = vmatprep.subr.bf16.mxu0 %v820
      %1116 = vmatpush1.bf16.msra.mxu0 %v819
      %1117 = vmatprep.subr.bf16.mxu0 0
      %1118 = vmatpush1.bf16.msra.mxu0 0
      %1119 = vmatprep.subr.bf16.mxu0 0
      %1120 = vmatpush1.bf16.msra.mxu0 0
      %1121 = vmatprep.subr.bf16.mxu0 0
      %1122 = vmatpush1.bf16.msra.mxu0 0
      %1123 = vmatprep.subr.bf16.mxu0 0
      %1124 = vmatpush1.bf16.msra.mxu0 0
      %1125 = vmatprep.subr.bf16.mxu0 0
      %1126 = vmatpush1.bf16.msra.mxu0 0
      %1127 = vmatprep.mubr.bf16.mxu0 %v931
      %1128 = vmatmul.mubr.bf16.gmra.mrb[0].mxu0 %v377
      %v1129 = vpop.f32.mrb[0].mxu0
      %v1130 = vadd.f32 %v1077, %v1129
      %v1131 = vpop.f32.mrb[0].mxu0
      %v1132 = vadd.f32 %v1079, %v1131
      %v1133 = vpop.f32.mrb[0].mxu0
      %v1134 = vadd.f32 %v1081, %v1133
      %v1135 = vpop.f32.mrb[0].mxu0
      %v1136 = vadd.f32 %v1083, %v1135
      %1137 = vmatprep.mubr.bf16.mxu0 %v934
      %1138 = vmatmul.mubr.bf16.gmra.mrb[0].mxu0 %v381
      %v1139 = vpop.f32.mrb[0].mxu0
      %v1140 = vadd.f32 %v1087, %v1139
      %v1141 = vpop.f32.mrb[0].mxu0
      %v1142 = vadd.f32 %v1089, %v1141
      %v1143 = vpop.f32.mrb[0].mxu0
      %v1144 = vadd.f32 %v1091, %v1143
      %v1145 = vpop.f32.mrb[0].mxu0
      %v1146 = vadd.f32 %v1093, %v1145
      %1147 = vdwg.mxu0
      %1148 = vst [vmem:[%s208] sm:$0xff] %v1024
      %1149 = vst [vmem:[%s208 + $0x8] sm:$0xff] %v1026
      %1150 = vst [vmem:[%s208 + $0x10] sm:$0xff] %v1130
      %1151 = vst [vmem:[%s208 + $0x18] sm:$0xff] %v1132
      %1152 = vst [vmem:[%s208 + $0x20] sm:$0xff] %v1028
      %1153 = vst [vmem:[%s208 + $0x28] sm:$0xff] %v1030
      %1154 = vst [vmem:[%s208 + $0x30] sm:$0xff] %v1134
      %1155 = vst [vmem:[%s208 + $0x38] sm:$0xff] %v1136
      %1156 = vst [vmem:[%s208 + $0x40] sm:$0xff] %v1034
      %1157 = vst [vmem:[%s208 + $0x48] sm:$0xff] %v1036
      %1158 = vst [vmem:[%s208 + $0x50] sm:$0xff] %v1140
      %1159 = vst [vmem:[%s208 + $0x58] sm:$0xff] %v1142
      %1160 = vst [vmem:[%s208 + $0x60] sm:$0xff] %v1038
      %1161 = vst [vmem:[%s208 + $0x68] sm:$0xff] %v1040
      %1162 = vst [vmem:[%s208 + $0x70] sm:$0xff] %v1144
      %1163 = vst [vmem:[%s208 + $0x78] sm:$0xff] %v1146
      %s1164 = smul.u32 4, %s19
      %p1165 = scmp.lt.s32.totalorder %s18, 1
      %s1166 = scalar_select %p1165, %s18, 1
      %p1167 = scmp.lt.s32.totalorder %s1164, 3
      %s1168 = scalar_select %p1167, %s1164, 3
      %s1169 = smul.addr %s1166, 16
      %s1170 = sadd.s32 %s1168, %s1169
      %s1171 = smul.addr %s1170, 8
      %s1172 = scalar_lea.vmem %s3, %s1171
      // Predicated region
      $region33: #{endown_forward.1} parent=31 // pred_check
        %p1173 = pneg %p116
      $region34: #{endown_forward.1} parent=31 // pred_check_branch
        %1175 = sbr.rel (%p1173) target = $region36
      $region35: #{endown_forward.1} parent=31 // pred_region
        %s1176 = smul.u32 4, %s19
      $region36: #{endown_forward.1} parent=31 // pred_fallthru
        _
    $region32: #{endown_forward.1} parent=5 // pred_fallthru
      _
    %p1177 = scmp.le.s32.totalorder 2, %s9
    // Predicated region
    $region37: #{endown_forward.1} parent=5 // pred_check
      %p1178 = pneg %p1177
    $region38: #{endown_forward.1} parent=5 // pred_check_branch
      %1180 = sbr.rel (%p1178) target = $region40
    $region39: #{endown_forward.1} parent=5 // pred_region
      %s1181 = ssub.s32 %s9, 2
      // Predicated region
      $region41: #{endown_forward.1} parent=39 // pred_check
        %p1182 = pneg %p122
      $region42: #{endown_forward.1} parent=39 // pred_check_branch
        %1184 = sbr.rel (%p1182) target = $region44
      $region43: #{endown_forward.1} parent=39 // pred_region
        %s1185 = smul.u32 4, %s21
        %p1186 = scmp.lt.s32.totalorder %s20, 1
        %s1187 = scalar_select %p1186, %s20, 1
        %p1188 = scmp.lt.s32.totalorder %s1185, 3
        %s1189 = scalar_select %p1188, %s1185, 3
        %s1190 = smul.addr %s1187, 16
        %s1191 = sadd.s32 %s1189, %s1190
        %s1192 = smul.addr %s1191, 8
        %s1193 = scalar_lea.vmem %s3, %s1192
      $region44: #{endown_forward.1} parent=39 // pred_fallthru
        _
    $region40: #{endown_forward.1} parent=5 // pred_fallthru
      _
  $region6: #{endown_forward.1} parent=0 // loop_footer
    %s13 = sadd.s32 1, %s9
  $region7: #{endown_forward.1} parent=0 // loop_footer_branch
    %8 = sbr.rel target = $region3
  $region8: #{endown_forward.1} parent=0 // loop_exit
    _

</llo_original>
